<compile_context>
chip_gen: v7x
topology: tpu7x:2x2x1
jax: 0.10.0
libtpu: 0.0.40
codegen_flags: <defaults>
</compile_context>

<pallas_src>
import jax
import jax.numpy as jnp
from jax.experimental import pallas as pl
from jax.experimental.pallas import tpu as pltpu


def _round_up(x, m):
    return ((x + m - 1) // m) * m


def _pick_tile(dim, candidates=(512, 256, 128)):
    for c in candidates:
        if dim % c == 0:
            return c
    return dim


def _dual_cls_kernel(a_ref, w_ref, b_ref, o_ref, acc_ref):
    # a_ref:   (tm, tk) activation tile (CLS rows), input dtype (cast to bf16)
    # w_ref:   (tk, tn) bf16 BN-folded weight tile
    # b_ref:   (1, tn)  f32 folded bias
    # o_ref:   (tm, tn) f32 output tile (resident across the K axis)
    # acc_ref: (tm, tn) f32 accumulator scratch
    k = pl.program_id(2)

    @pl.when(k == 0)
    def _init():
        acc_ref[...] = jnp.zeros_like(acc_ref)

    a = a_ref[...].astype(jnp.bfloat16)
    acc_ref[...] += jnp.dot(a, w_ref[...], preferred_element_type=jnp.float32)

    @pl.when(k == pl.num_programs(2) - 1)
    def _finalize():
        o_ref[...] = (acc_ref[...] + b_ref[...]).astype(o_ref.dtype)


def dual_cls_backend(x, params, eps=1e-5):
    """Forward of DualCLSBackend (use_pooling=False), BN in inference mode.

    x: (B, T1, T2, in_dim) float. Returns (B, hidden_dim) float32.
    """
    assert x.ndim == 4, f"Input size error in pooling. Need 4, but get {x.ndim}"
    w = params["w"]                      # (in_dim, hidden_dim) == fc.weight.T
    b = params["b"]
    gamma, beta = params["gamma"], params["beta"]
    running_mean, running_var = params["running_mean"], params["running_var"]

    B, T1, T2, Din = x.shape
    H = w.shape[1]

    # ---- fold BatchNorm1d (inference) into the linear layer (one-time glue) ----
    scale = gamma.astype(jnp.float32) * jax.lax.rsqrt(
        running_var.astype(jnp.float32) + eps)
    w_folded = w.astype(jnp.float32) * scale[None, :]
    bias_folded = (b.astype(jnp.float32) - running_mean.astype(jnp.float32)) * scale \
        + beta.astype(jnp.float32)

    # ---- tiling decisions ----
    H_pad = _round_up(H, 128)
    tn = 256 if (H_pad % 256 == 0) else 128

    fused_gather = (Din % 128 == 0)
    if fused_gather:
        # DMA the CLS rows straight out of x: reshape (metadata-only) to
        # (B, T1*T2*Din); the K grid extent only covers the first Din columns.
        Din_pad = Din
        a_input = x.reshape(B, T1 * T2 * Din)
        Bm = B
    else:
        # Fallback: slice + zero-pad so all blocks stay (8, 128)-aligned.
        Din_pad = _round_up(Din, 128)
        Bm = _round_up(B, 8)
        cls = x[:, 0, 0, :]
        a_input = jnp.zeros((Bm, Din_pad), x.dtype).at[:B, :Din].set(cls)

    tk = _pick_tile(Din_pad)
    tm = min(Bm, 256)

    w_p = jnp.pad(w_folded, ((0, Din_pad - Din), (0, H_pad - H))).astype(jnp.bfloat16)
    bias_p = jnp.pad(bias_folded, (0, H_pad - H)).reshape(1, H_pad).astype(jnp.float32)

    grid = (pl.cdiv(Bm, tm), H_pad // tn, Din_pad // tk)

    out = pl.pallas_call(
        _dual_cls_kernel,
        out_shape=jax.ShapeDtypeStruct((Bm, H_pad), jnp.float32),
        grid_spec=pltpu.PrefetchScalarGridSpec(
            num_scalar_prefetch=0,
            grid=grid,
            in_specs=[
                pl.BlockSpec((tm, tk), lambda i, j, k: (i, k)),   # CLS rows
                pl.BlockSpec((tk, tn), lambda i, j, k: (k, j)),   # folded weight
                pl.BlockSpec((1, tn), lambda i, j, k: (0, j)),    # folded bias
            ],
            out_specs=pl.BlockSpec((tm, tn), lambda i, j, k: (i, j)),
            scratch_shapes=[pltpu.VMEM((tm, tn), jnp.float32)],
        ),
        compiler_params=pltpu.CompilerParams(
            dimension_semantics=("parallel", "parallel", "arbitrary"),
        ),
        cost_estimate=pl.CostEstimate(
            flops=2 * B * Din * H,
            transcendentals=0,
            bytes_accessed=(Bm * Din_pad * x.dtype.itemsize   # activations
                            + Din_pad * H_pad * 2             # bf16 weights
                            + H_pad * 4                       # bias
                            + Bm * H_pad * 4),                # output
        ),
    )(a_input, w_p, bias_p)

    return out[:B, :H]


def init_params(key, in_dim, hidden_dim):
    """Deterministic synthetic parameters (shapes match nn.Linear/nn.BatchNorm1d)."""
    k_w, k_b, k_g, k_bt, k_m, k_v = jax.random.split(key, 6)
    bound = 1.0 / jnp.sqrt(in_dim)
    # Stored as (in_dim, hidden_dim) == transpose of PyTorch's (hidden, in) weight.
    w = jax.random.uniform(k_w, (in_dim, hidden_dim), jnp.float32, -bound, bound)
    b = jax.random.uniform(k_b, (hidden_dim,), jnp.float32, -bound, bound)
    gamma = 1.0 + 0.1 * jax.random.normal(k_g, (hidden_dim,), jnp.float32)
    beta = 0.1 * jax.random.normal(k_bt, (hidden_dim,), jnp.float32)
    running_mean = 0.05 * jax.random.normal(k_m, (hidden_dim,), jnp.float32)
    running_var = jnp.abs(1.0 + 0.1 * jax.random.normal(k_v, (hidden_dim,), jnp.float32))
    return {
        "w": w, "b": b, "gamma": gamma, "beta": beta,
        "running_mean": running_mean, "running_var": running_var,
    }


def _reference(x, params, eps=1e-5):
    """Pure-JAX f32 reference of the same forward (eval-mode BN)."""
    cls = x[:, 0, 0, :]
    y = cls @ params["w"] + params["b"]
    inv = 1.0 / jnp.sqrt(params["running_var"] + eps)
    return (y - params["running_mean"]) * inv * params["gamma"] + params["beta"]


if __name__ == "__main__":
    key = jax.random.PRNGKey(0)

    # Case 0 exercises the fused CLS-gather path (128-aligned in_dim, aligned B);
    # case 1 exercises the padded fallback path (ragged in_dim/hidden_dim, B=2).
    cases = [
        (8, 5, 5, 128, 128),
        (2, 5, 5, 32, 48),
    ]

    for idx, (B, T1, T2, in_dim, hidden_dim) in enumerate(cases):
        k_x, k_p = jax.random.split(jax.random.fold_in(key, idx))
        x = jax.random.normal(k_x, (B, T1, T2, in_dim), jnp.float32)
        params = init_params(k_p, in_dim, hidden_dim)

        out = jax.block_until_ready(dual_cls_backend(x, params))
        ref = _reference(x, params)

        assert out.shape == (B, hidden_dim), out.shape
        # bf16 weights/activations (f32 accumulate) => loosened tolerance vs f32 ref.
        assert jnp.allclose(out, ref, atol=2e-2, rtol=2e-2), (
            f"mismatch vs reference (case {idx}): "
            f"max_abs_err={float(jnp.max(jnp.abs(out - ref)))}"
        )

    print("KERNEL_OK")
</pallas_src>

<mosaic_0001>
module attributes {stable_mosaic.version = 11 : i64} {
  func.func @_dual_cls_kernel(%arg0: i32, %arg1: i32, %arg2: i32, %arg3: memref<8x128xf32, #tpu.memory_space<vmem>>, %arg4: memref<128x128xbf16, #tpu.memory_space<vmem>>, %arg5: memref<1x128xf32, #tpu.memory_space<vmem>>, %arg6: memref<8x128xf32, #tpu.memory_space<vmem>>, %arg7: memref<8x128xf32, #tpu.memory_space<vmem>>) attributes {dimension_semantics = [#tpu.dimension_semantics<parallel>, #tpu.dimension_semantics<parallel>, #tpu.dimension_semantics<arbitrary>], iteration_bounds = array<i64: 1, 1, 1>, scalar_prefetch = 0 : i64, scratch_operands = 1 : i64, tpu.core_type = #tpu.core_type<tc>, window_params = [{transform_indices = @transform_0, window_bounds = array<i64: 8, 128>}, {transform_indices = @transform_1, window_bounds = array<i64: 128, 128>}, {transform_indices = @transform_2, window_bounds = array<i64: 1, 128>}, {transform_indices = @transform_3, window_bounds = array<i64: 8, 128>}]} {
    %c0_i32 = arith.constant 0 : i32
    %0 = arith.cmpi eq, %arg2, %c0_i32 : i32
    %1 = arith.extui %0 : i1 to i32
    %c0_i32_0 = arith.constant 0 : i32
    %2 = arith.cmpi ne, %1, %c0_i32_0 : i32
    scf.if %2 {
      %cst_10 = arith.constant 0.000000e+00 : f32
      %13 = vector.broadcast %cst_10 : f32 to vector<8x128xf32>
      %c0_11 = arith.constant 0 : index
      %c0_12 = arith.constant 0 : index
      %14 = vector.load %arg7[%c0_11, %c0_12] : memref<8x128xf32, #tpu.memory_space<vmem>>, vector<8x128xf32>
      tpu.vector_store %arg7[%c0_11, %c0_12], %13 {strides = array<i32>} : memref<8x128xf32, #tpu.memory_space<vmem>>, vector<8x128xf32>,
    } else {
    }
    %c0 = arith.constant 0 : index
    %c0_1 = arith.constant 0 : index
    %3 = vector.load %arg3[%c0, %c0_1] : memref<8x128xf32, #tpu.memory_space<vmem>>, vector<8x128xf32>
    %4 = arith.truncf %3 : vector<8x128xf32> to vector<8x128xbf16>
    %c0_2 = arith.constant 0 : index
    %c0_3 = arith.constant 0 : index
    %5 = vector.load %arg7[%c0_2, %c0_3] : memref<8x128xf32, #tpu.memory_space<vmem>>, vector<8x128xf32>
    %c0_4 = arith.constant 0 : index
    %c0_5 = arith.constant 0 : index
    %6 = vector.load %arg4[%c0_4, %c0_5] : memref<128x128xbf16, #tpu.memory_space<vmem>>, vector<128x128xbf16>
    %cst = arith.constant dense<0.000000e+00> : vector<8x128xf32>
    %7 = tpu.matmul %4, %6, %cst {dimension_numbers = #tpu.dot_dimension_numbers<[1], [0], [0], [1], [0, 0, 1, 1], [], []>} : vector<8x128xbf16>, vector<128x128xbf16>, vector<8x128xf32> -> vector<8x128xf32>
    %8 = arith.addf %5, %7 : vector<8x128xf32>
    %c0_6 = arith.constant 0 : index
    %c0_7 = arith.constant 0 : index
    %9 = vector.load %arg7[%c0_6, %c0_7] : memref<8x128xf32, #tpu.memory_space<vmem>>, vector<8x128xf32>
    tpu.vector_store %arg7[%c0_6, %c0_7], %8 {strides = array<i32>} : memref<8x128xf32, #tpu.memory_space<vmem>>, vector<8x128xf32>,
    %c0_i32_8 = arith.constant 0 : i32
    %10 = arith.cmpi eq, %arg2, %c0_i32_8 : i32
    %11 = arith.extui %10 : i1 to i32
    %c0_i32_9 = arith.constant 0 : i32
    %12 = arith.cmpi ne, %11, %c0_i32_9 : i32
    scf.if %12 {
      %c0_10 = arith.constant 0 : index
      %c0_11 = arith.constant 0 : index
      %13 = vector.load %arg7[%c0_10, %c0_11] : memref<8x128xf32, #tpu.memory_space<vmem>>, vector<8x128xf32>
      %c0_12 = arith.constant 0 : index
      %c0_13 = arith.constant 0 : index
      %14 = vector.load %arg5[%c0_12, %c0_13] : memref<1x128xf32, #tpu.memory_space<vmem>>, vector<1x128xf32>
      %15 = vector.broadcast %14 : vector<1x128xf32> to vector<8x128xf32>
      %16 = arith.addf %13, %15 : vector<8x128xf32>
      %c0_14 = arith.constant 0 : index
      %c0_15 = arith.constant 0 : index
      %17 = vector.load %arg6[%c0_14, %c0_15] : memref<8x128xf32, #tpu.memory_space<vmem>>, vector<8x128xf32>
      tpu.vector_store %arg6[%c0_14, %c0_15], %16 {strides = array<i32>} : memref<8x128xf32, #tpu.memory_space<vmem>>, vector<8x128xf32>,
    } else {
    }
    return
  }
  func.func @transform_0(%arg0: i32, %arg1: i32, %arg2: i32) -> (i32, i32) {
    %c0_i32 = arith.constant 0 : i32
    return %arg0, %arg2 : i32, i32
  }
  func.func @transform_1(%arg0: i32, %arg1: i32, %arg2: i32) -> (i32, i32) {
    %c0_i32 = arith.constant 0 : i32
    return %arg2, %arg1 : i32, i32
  }
  func.func @transform_2(%arg0: i32, %arg1: i32, %arg2: i32) -> (i32, i32) {
    %c0_i32 = arith.constant 0 : i32
    %c0_i32_0 = arith.constant 0 : i32
    return %c0_i32, %arg1 : i32, i32
  }
  func.func @transform_3(%arg0: i32, %arg1: i32, %arg2: i32) -> (i32, i32) {
    %c0_i32 = arith.constant 0 : i32
    return %arg0, %arg1 : i32, i32
  }
}

</mosaic_0001>

<llo_original>
// kernel: tpu_custom_call.1
$region0: #{tpu_custom_call.1}
  #allocation0 [shape = 'u32[]', space=smem, size = 0x4, offset = 0x4, fixed_abs, tag = 'smem constant byte address 0x4 - core index']
  #allocation1 [shape = 'u32[144,128]{1,0:T(1,128)}', space=vmem, size = 0x12000, scoped, tag = 'internal scratch']
  #allocation2 [shape = 'f32[8,128]{1,0:T(8,128)}', space=vmem, size = 0x1000, scoped, tag = 'scratch operand']
  %s0 = inlined_call_operand.hbm [shape: f32[8,3200], index: 0, kind: input, shape index: {}]
  %s1 = inlined_call_operand.hbm [shape: bf16[128,128], index: 1, kind: input, shape index: {}]
  %s2 = inlined_call_operand.vmem [shape: f32[1,128], index: 2, kind: input, shape index: {}]
  %s3 = inlined_call_operand.hbm [shape: f32[8,128], index: 3, kind: output, shape index: {}]
  %s4 = sld [smem:[#allocation0]]
  $region38: #{tpu_custom_call.1} parent=0
    _
  %s6 = ssub.s32 1, %s4
  %s7 = scalar_select 0, %s6, %s4
  $region1: #{tpu_custom_call.1} parent=0
    #allocation3 [shape = 'u8[4096]{0}', space=vmem, size = 0x1000, scoped, tag = 'input window, operand 0, single buffered']
    #allocation4 [shape = 's32[1]{0}', space=sflag, size = 0x4, scoped, tag = 'scoped memory for tpu_custom_call.1']
    #allocation5 [shape = 's32[1]{0}', space=sflag, size = 0x4, scoped, tag = 'scoped memory for tpu_custom_call.1']
    #allocation6 [shape = 'u8[32768]{0}', space=vmem, size = 0x8000, scoped, tag = 'input window, operand 1, single buffered']
    #allocation7 [shape = 's32[1]{0}', space=sflag, size = 0x4, scoped, tag = 'scoped memory for tpu_custom_call.1']
    #allocation8 [shape = 'u8[4096]{0}', space=vmem, size = 0x1000, scoped, tag = 'output window, operand 0, single buffered']
    %8 = vsyncpa [#allocation4], 0
    %9 = vsyncpa [#allocation7], 0
    %10 = vsyncpa [#allocation5], 0
    // Predicated region
    $region2: #{tpu_custom_call.1} parent=1 // pred_check
      _
    $region3: #{tpu_custom_call.1} parent=1 // pred_check_branch
      %12 = sbr.rel (0) target = $region5
    $region4: #{tpu_custom_call.1} parent=1 // pred_region
      %s14 = ssub.s32 128, 128
      %15 = vsyncadd [#allocation4], %s14
      %s17 = sshll.u32 [#allocation3], 4
      %s18 = int_to_ptr.vmem [resolvable:$true] %s17
      %20 = dma.hbm_to_vmem [thread:$0]  %s0, 128, %s18, [#allocation4]
    $region5: #{tpu_custom_call.1} parent=1 // pred_fallthru
      _
    // Predicated region
    $region6: #{tpu_custom_call.1} parent=1 // pred_check
      _
    $region7: #{tpu_custom_call.1} parent=1 // pred_check_branch
      %22 = sbr.rel (0) target = $region9
    $region8: #{tpu_custom_call.1} parent=1 // pred_region
      %s24 = ssub.s32 1024, 1024
      %25 = vsyncadd [#allocation7], %s24
      %s26 = sshll.u32 [#allocation6], 4
      %s27 = int_to_ptr.vmem [resolvable:$true] %s26
      %32 = dma.hbm_to_vmem [thread:$0]  %s1, 1024, %s27, [#allocation7], 64, 64, 4
    $region9: #{tpu_custom_call.1} parent=1 // pred_fallthru
      _
    // Predicated region
    $region10: #{tpu_custom_call.1} parent=1 // pred_check
      _
    $region11: #{tpu_custom_call.1} parent=1 // pred_check_branch
      %34 = sbr.rel (0) target = $region13
    $region12: #{tpu_custom_call.1} parent=1 // pred_region
      _
    $region13: #{tpu_custom_call.1} parent=1 // pred_fallthru
      _
    // Predicated region
    $region14: #{tpu_custom_call.1} parent=1 // pred_check
      _
    $region15: #{tpu_custom_call.1} parent=1 // pred_check_branch
      %36 = sbr.rel (0) target = $region17
    $region16: #{tpu_custom_call.1} parent=1 // pred_region
      %37 = dma.done [#allocation4], 128
    $region17: #{tpu_custom_call.1} parent=1 // pred_fallthru
      _
    // Predicated region
    $region18: #{tpu_custom_call.1} parent=1 // pred_check
      _
    $region19: #{tpu_custom_call.1} parent=1 // pred_check_branch
      %39 = sbr.rel (0) target = $region21
    $region20: #{tpu_custom_call.1} parent=1 // pred_region
      %40 = dma.done [#allocation7], 1024
    $region21: #{tpu_custom_call.1} parent=1 // pred_fallthru
      _
    %p42 = scmp.eq.s32.totalorder 0, 0
    // Predicated region
    $region22: #{tpu_custom_call.1} parent=1 // pred_check
      %p43 = pneg %p42
    $region23: #{tpu_custom_call.1} parent=1 // pred_check_branch
      %45 = sbr.rel (%p43) target = $region25
    $region24: #{tpu_custom_call.1} parent=1 // pred_region
      %46 = vst [vmem:[#allocation2] sm:$0xff] 0.0
    $region25: #{tpu_custom_call.1} parent=1 // pred_fallthru
      _
    %v47 = vld [vmem:[#allocation3] sm:$0xff]
    %v48 = vpack.c.bf16 %v47, %v47
    %v49 = vld [vmem:[#allocation2] sm:$0xff]
    %v50 = vld [vmem:[#allocation6] sm:$0xf]
    %v51 = vld [vmem:[#allocation6 + $0x4] sm:$0xf]
    %v52 = vld [vmem:[#allocation6 + $0x8] sm:$0xf]
    %v53 = vld [vmem:[#allocation6 + $0xc] sm:$0xf]
    %v54 = vld [vmem:[#allocation6 + $0x10] sm:$0xf]
    %v55 = vld [vmem:[#allocation6 + $0x14] sm:$0xf]
    %v56 = vld [vmem:[#allocation6 + $0x18] sm:$0xf]
    %v57 = vld [vmem:[#allocation6 + $0x1c] sm:$0xf]
    %v58 = vld [vmem:[#allocation6 + $0x20] sm:$0xf]
    %v59 = vld [vmem:[#allocation6 + $0x24] sm:$0xf]
    %v60 = vld [vmem:[#allocation6 + $0x28] sm:$0xf]
    %v61 = vld [vmem:[#allocation6 + $0x2c] sm:$0xf]
    %v62 = vld [vmem:[#allocation6 + $0x30] sm:$0xf]
    %v63 = vld [vmem:[#allocation6 + $0x34] sm:$0xf]
    %v64 = vld [vmem:[#allocation6 + $0x38] sm:$0xf]
    %v65 = vld [vmem:[#allocation6 + $0x3c] sm:$0xf]
    %v82 = vunpack.c.l.b16 %v50
    %v83 = vunpack.c.l.b16 %v51
    %v84 = vunpack.c.l.b16 %v52
    %v85 = vunpack.c.l.b16 %v53
    %v86 = vunpack.c.l.b16 %v54
    %v87 = vunpack.c.l.b16 %v55
    %v88 = vunpack.c.l.b16 %v56
    %v89 = vunpack.c.l.b16 %v57
    %v90 = vunpack.c.l.b16 %v58
    %v91 = vunpack.c.l.b16 %v59
    %v92 = vunpack.c.l.b16 %v60
    %v93 = vunpack.c.l.b16 %v61
    %v94 = vunpack.c.l.b16 %v62
    %v95 = vunpack.c.l.b16 %v63
    %v96 = vunpack.c.l.b16 %v64
    %v97 = vunpack.c.l.b16 %v65
    %v98 = vpack.c.b16 %v83, %v82
    %v99 = vpack.c.b16 %v85, %v84
    %v100 = vpack.c.b16 %v87, %v86
    %v101 = vpack.c.b16 %v89, %v88
    %v102 = vpack.c.b16 %v91, %v90
    %v103 = vpack.c.b16 %v93, %v92
    %v104 = vpack.c.b16 %v95, %v94
    %v105 = vpack.c.b16 %v97, %v96
    %114 = vmatprep.subr.bf16.mxu0 0
    %115 = vmatpush1.bf16.msra.mxu0 %v98
    %116 = vmatprep.subr.bf16.mxu0 0
    %117 = vmatpush1.bf16.msra.mxu0 %v99
    %118 = vmatprep.subr.bf16.mxu0 0
    %119 = vmatpush1.bf16.msra.mxu0 %v100
    %120 = vmatprep.subr.bf16.mxu0 0
    %121 = vmatpush1.bf16.msra.mxu0 %v101
    %122 = vmatprep.subr.bf16.mxu0 0
    %123 = vmatpush1.bf16.msra.mxu0 %v102
    %124 = vmatprep.subr.bf16.mxu0 0
    %125 = vmatpush1.bf16.msra.mxu0 %v103
    %126 = vmatprep.subr.bf16.mxu0 0
    %127 = vmatpush1.bf16.msra.mxu0 %v104
    %128 = vmatprep.subr.bf16.mxu0 0
    %129 = vmatpush1.bf16.msra.mxu0 %v105
    %130 = vmatprep.subr.bf16.mxu0 0
    %131 = vmatpush1.bf16.msra.mxu0 0
    %132 = vmatprep.subr.bf16.mxu0 0
    %133 = vmatpush1.bf16.msra.mxu0 0
    %134 = vmatprep.subr.bf16.mxu0 0
    %135 = vmatpush1.bf16.msra.mxu0 0
    %136 = vmatprep.subr.bf16.mxu0 0
    %137 = vmatpush1.bf16.msra.mxu0 0
    %138 = vmatprep.subr.bf16.mxu0 0
    %139 = vmatpush1.bf16.msra.mxu0 0
    %140 = vmatprep.subr.bf16.mxu0 0
    %141 = vmatpush1.bf16.msra.mxu0 0
    %142 = vmatprep.subr.bf16.mxu0 0
    %143 = vmatpush1.bf16.msra.mxu0 0
    %144 = vmatprep.subr.bf16.mxu0 0
    %145 = vmatpush1.bf16.msra.mxu0 0
    %146 = vmatprep.mubr.bf16.mxu0 0
    %147 = vmatmul.mubr.bf16.gmra.mrb[0].mxu0 %v48
    %v148 = vpop.f32.mrb[0].mxu0
    %v149 = vadd.f32 0.0, %v148
    %v150 = vpop.f32.mrb[0].mxu0
    %v151 = vpop.f32.mrb[0].mxu0
    %v152 = vpop.f32.mrb[0].mxu0
    %153 = vdwg.mxu0
    %v154 = vadd.f32 %v49, %v149
    %155 = vst [vmem:[#allocation2] sm:$0xff] %v154
    // Predicated region
    $region26: #{tpu_custom_call.1} parent=1 // pred_check
      %p156 = pneg %p42
    $region27: #{tpu_custom_call.1} parent=1 // pred_check_branch
      %158 = sbr.rel (%p156) target = $region29
    $region28: #{tpu_custom_call.1} parent=1 // pred_region
      %v159 = vld [vmem:[#allocation2] sm:$0xff]
      %v160 = vld [vmem:[%s2] sm:$0x1]
      %v162 = vlaneseq
      %v163 = vshrl.u32 %v162, 7
      %v164 = vsub.s32 0, %v163
      %v165 = vrot.slane %v160, %v164
      %v167 = vadd.f32 %v159, %v165
      %168 = vst [vmem:[#allocation8] sm:$0xff] %v167
    $region29: #{tpu_custom_call.1} parent=1 // pred_fallthru
      _
    // Predicated region
    $region30: #{tpu_custom_call.1} parent=1 // pred_check
      _
    $region31: #{tpu_custom_call.1} parent=1 // pred_check_branch
      %170 = sbr.rel (0) target = $region33
    $region32: #{tpu_custom_call.1} parent=1 // pred_region
      %s172 = ssub.s32 128, 128
      %173 = vsyncadd [#allocation5], %s172
      %s175 = sshll.u32 [#allocation8], 4
      %s176 = int_to_ptr.vmem [resolvable:$true] %s175
      %178 = dma.vmem_to_hbm [thread:$0]  %s176, 128, %s3, [#allocation5]
    $region33: #{tpu_custom_call.1} parent=1 // pred_fallthru
      _
    // Predicated region
    $region34: #{tpu_custom_call.1} parent=1 // pred_check
      _
    $region35: #{tpu_custom_call.1} parent=1 // pred_check_branch
      %180 = sbr.rel (0) target = $region37
    $region36: #{tpu_custom_call.1} parent=1 // pred_region
      %181 = dma.done [#allocation5], 128
    $region37: #{tpu_custom_call.1} parent=1 // pred_fallthru
      _
    %182 = vsyncpa [#allocation4], 1
    %183 = vsyncpa [#allocation7], 1
    %184 = vsyncpa [#allocation5], 1

</llo_original>
